<compile_context>
chip_gen: v7x
topology: tpu7x:2x2x1
jax: 0.10.0
libtpu: 0.0.40
codegen_flags: <defaults>
</compile_context>

<pallas_src>
import jax
import jax.numpy as jnp
from jax import lax
from jax.experimental import pallas as pl
from jax.experimental.pallas import tpu as pltpu


def _round_up(x, m):
    return (x + m - 1) // m * m


def label_bilinear_kernel(x1_ref, x2_ref, w1_ref, w2_ref, sel_ref, bias_ref, o_ref):
    # Per grid step (RA = round_up(L*in2, 8), Lp = round_up(L, 8), Wr = 2*RA + Lp):
    #   x1_ref  : [tm, in1]   activation row tile (natural layout, no concat copy)
    #   x2_ref  : [tm, in2]
    #   w1_ref  : [Wr, in1]   fused transposed weight slab (resident across steps)
    #   w2_ref  : [Wr, in2]
    #   sel_ref : [Lp, RA]    0/1 collapse matrix, sel[l, l*in2 + j] = 1
    #   bias_ref: [Lp, 1]
    #   o_ref   : [Lp, tm]    transposed, lane-dense output tile (dense stores)
    ra = sel_ref.shape[1]
    lp = sel_ref.shape[0]
    nt = (((1,), (1,)), ((), ()))          # contract the last dim of both operands
    cdt = w1_ref.dtype
    x1 = x1_ref[...].astype(cdt)           # no-op unless an MXU dtype override is set
    x2 = x2_ref[...].astype(cdt)

    # One fused NT matmul per operand.  Row regions of the result:
    #   [0, RA)        tmp[l*in2+j, m]   = sum_i x1[m,i] W[l,i,j]
    #   [RA, 2RA)      x2rep[l*in2+j, m] = x2[m, j]     (replication folded into MXU)
    #   [2RA, 2RA+Lp)  lin[l, m]         = w_lin[l, :] . cat(x1, x2)[m, :]
    fused = lax.dot_general(w1_ref[...], x1, nt, preferred_element_type=jnp.float32)
    fused = fused + lax.dot_general(w2_ref[...], x2, nt,
                                    preferred_element_type=jnp.float32)

    prod = fused[:ra, :] * fused[ra:2 * ra, :]          # aligned whole-vreg row slices
    bil = jnp.dot(sel_ref[...], prod,
                  preferred_element_type=jnp.float32)   # [Lp, tm] collapse over j
    lin = fused[2 * ra:2 * ra + lp, :]                  # [Lp, tm]
    o_ref[...] = (bil + lin + bias_ref[...]).astype(o_ref.dtype)


def label_bilinear(x1, x2, w_bil, b_bil, w_lin, *, tm=1024, mxu_dtype=None):
    """Pallas-TPU forward of fastNLP LabelBilinear.

    x1: [B, S, in1], x2: [B, S, in2]
    w_bil: [L, in1, in2], b_bil: [L], w_lin: [L, in1+in2]   (PyTorch layouts)
    mxu_dtype: optional dtype (e.g. jnp.bfloat16) for the MXU operands on v6e/v7x.
    returns [B, S, L]
    """
    B, S, in1 = x1.shape
    in2 = x2.shape[2]
    L = w_bil.shape[0]
    N = B * S
    dt = x1.dtype
    mdt = jnp.dtype(mxu_dtype) if mxu_dtype is not None else jnp.dtype(dt)

    RA = _round_up(L * in2, 8)       # bilinear / replication region rows (8-aligned)
    Lp = _round_up(L, 8)             # label rows, padded to a sublane tile
    Wr = 2 * RA + Lp                 # total fused-weight rows

    # ---------------- tile sizing ----------------
    tm_align = 128                   # output lane tile
    tm = _round_up(max(tm, tm_align), tm_align)
    # Keep >= ~4 grid steps so both v7x TensorCores get work; don't over-pad tiny N.
    tm = min(tm, _round_up(pl.cdiv(N, 4), tm_align))
    tm = max(tm, tm_align)

    dsz = jnp.dtype(dt).itemsize
    msz = mdt.itemsize

    def vmem_est(t):
        lane = lambda n: _round_up(n, 128)
        return (2 * t * (lane(in1) + lane(in2)) * dsz          # x tiles, double-buffered
                + 2 * Wr * (lane(in1) + lane(in2)) * msz       # resident fused weights
                + 2 * Lp * lane(RA) * 4 + 2 * Lp * 128 * 4     # sel, bias
                + 2 * Lp * lane(t) * dsz                       # output tile
                + (Wr + RA + 2 * Lp) * lane(t) * 4)            # f32 intermediates

    while tm > tm_align and vmem_est(tm) > 24 * 2 ** 20:
        tm = max(tm_align, _round_up(tm // 2, tm_align))
    est = vmem_est(tm)
    vmem_limit = (None if est <= 12 * 2 ** 20
                  else int(min(64 * 2 ** 20, max(32 * 2 ** 20, int(1.6 * est)))))

    n_pad = _round_up(N, tm)

    # ------------- activations: no concat copy; pad rows only if needed -------------
    x1r = x1.reshape(N, in1)
    x2r = x2.reshape(N, in2)
    if n_pad != N:
        x1r = jnp.pad(x1r, ((0, n_pad - N), (0, 0)))
        x2r = jnp.pad(x2r, ((0, n_pad - N), (0, 0)))

    # ------------- fused, transposed weight slabs (plain-JAX glue) -------------
    f32 = jnp.float32
    bil_rows = jnp.transpose(w_bil.astype(f32), (0, 2, 1)).reshape(L * in2, in1)
    w1 = jnp.concatenate([
        jnp.pad(bil_rows, ((0, RA - L * in2), (0, 0))),          # region A: bilinear
        jnp.zeros((RA, in1), f32),                               # region B: (x2 only)
        jnp.pad(w_lin[:, :in1].astype(f32), ((0, Lp - L), (0, 0))),  # region C: linear
    ], axis=0).astype(mdt)                                       # [Wr, in1]

    rep = jnp.tile(jnp.eye(in2, dtype=f32), (L, 1))              # row l*in2+j -> e_j
    w2 = jnp.concatenate([
        jnp.zeros((RA, in2), f32),                               # region A: (x1 only)
        jnp.pad(rep, ((0, RA - L * in2), (0, 0))),               # region B: x2 replication
        jnp.pad(w_lin[:, in1:].astype(f32), ((0, Lp - L), (0, 0))),  # region C: linear
    ], axis=0).astype(mdt)                                       # [Wr, in2]

    sel = jnp.pad(jnp.repeat(jnp.eye(L, dtype=f32), in2, axis=1),
                  ((0, Lp - L), (0, RA - L * in2)))              # [Lp, RA]
    bias2 = jnp.pad(b_bil.astype(f32), (0, Lp - L)).reshape(Lp, 1)

    out_t = pl.pallas_call(
        label_bilinear_kernel,
        out_shape=jax.ShapeDtypeStruct((Lp, n_pad), dt),
        grid_spec=pltpu.PrefetchScalarGridSpec(
            num_scalar_prefetch=0,
            grid=(n_pad // tm,),
            in_specs=[
                pl.BlockSpec((tm, in1), lambda i: (i, 0)),
                pl.BlockSpec((tm, in2), lambda i: (i, 0)),
                pl.BlockSpec((Wr, in1), lambda i: (0, 0)),
                pl.BlockSpec((Wr, in2), lambda i: (0, 0)),
                pl.BlockSpec((Lp, RA), lambda i: (0, 0)),
                pl.BlockSpec((Lp, 1), lambda i: (0, 0)),
            ],
            out_specs=pl.BlockSpec((Lp, tm), lambda i: (0, i)),
        ),
        compiler_params=pltpu.CompilerParams(
            dimension_semantics=("parallel",),
            vmem_limit_bytes=vmem_limit),
    )(x1r, x2r, w1, w2, sel, bias2)

    # Transposed, lane-dense kernel output -> [B, S, L] (wrapper-side layout plumbing).
    return out_t[:L, :N].T.reshape(B, S, L)


def label_bilinear_ref(x1, x2, w_bil, b_bil, w_lin):
    bil = jnp.einsum("bsi,lij,bsj->bsl", x1, w_bil, x2) + b_bil
    lin = jnp.einsum("bsk,lk->bsl", jnp.concatenate([x1, x2], axis=2), w_lin)
    return bil + lin


if __name__ == "__main__":
    # Small shapes consistent with the module: batch=2, seq=8, in1=in2=32, num_label=8
    B, S, in1, in2, L = 2, 8, 32, 32, 8

    key = jax.random.PRNGKey(0)
    k1, k2, k3, k4, k5 = jax.random.split(key, 5)

    x1 = jax.random.normal(k1, (B, S, in1), dtype=jnp.float32)
    x2 = jax.random.normal(k2, (B, S, in2), dtype=jnp.float32)

    # Deterministic parameter init (uniform, like PyTorch's fan-based defaults).
    bound_bil = 1.0 / jnp.sqrt(jnp.float32(in1))
    bound_lin = 1.0 / jnp.sqrt(jnp.float32(in1 + in2))
    w_bil = jax.random.uniform(k3, (L, in1, in2), jnp.float32, -bound_bil, bound_bil)
    b_bil = jax.random.uniform(k4, (L,), jnp.float32, -bound_bil, bound_bil)
    w_lin = jax.random.uniform(k5, (L, in1 + in2), jnp.float32, -bound_lin, bound_lin)

    out = label_bilinear(x1, x2, w_bil, b_bil, w_lin)
    out = jax.block_until_ready(out)

    ref = label_bilinear_ref(x1, x2, w_bil, b_bil, w_lin)
    assert out.shape == (B, S, L)
    assert jnp.allclose(out, ref, atol=1e-3, rtol=1e-3)

    print("KERNEL_OK")
</pallas_src>

<mosaic_0001>
module attributes {stable_mosaic.version = 11 : i64} {
  func.func @label_bilinear_kernel(%arg0: i32, %arg1: memref<128x32xf32, #tpu.memory_space<vmem>>, %arg2: memref<128x32xf32, #tpu.memory_space<vmem>>, %arg3: memref<520x32xf32, #tpu.memory_space<vmem>>, %arg4: memref<520x32xf32, #tpu.memory_space<vmem>>, %arg5: memref<8x256xf32, #tpu.memory_space<vmem>>, %arg6: memref<8x1xf32, #tpu.memory_space<vmem>>, %arg7: memref<8x128xf32, #tpu.memory_space<vmem>>) attributes {dimension_semantics = [#tpu.dimension_semantics<parallel>], iteration_bounds = array<i64: 1>, scalar_prefetch = 0 : i64, scratch_operands = 0 : i64, tpu.core_type = #tpu.core_type<tc>, window_params = [{transform_indices = @transform_0, window_bounds = array<i64: 128, 32>}, {transform_indices = @transform_1, window_bounds = array<i64: 128, 32>}, {pipeline_mode = #tpu.pipeline_mode<synchronous>, transform_indices = @transform_2, window_bounds = array<i64: 520, 32>}, {pipeline_mode = #tpu.pipeline_mode<synchronous>, transform_indices = @transform_3, window_bounds = array<i64: 520, 32>}, {pipeline_mode = #tpu.pipeline_mode<synchronous>, transform_indices = @transform_4, window_bounds = array<i64: 8, 256>}, {pipeline_mode = #tpu.pipeline_mode<synchronous>, transform_indices = @transform_5, window_bounds = array<i64: 8, 1>}, {transform_indices = @transform_6, window_bounds = array<i64: 8, 128>}]} {
    %c0 = arith.constant 0 : index
    %c0_0 = arith.constant 0 : index
    %0 = vector.load %arg1[%c0, %c0_0] : memref<128x32xf32, #tpu.memory_space<vmem>>, vector<128x32xf32>
    %c0_1 = arith.constant 0 : index
    %c0_2 = arith.constant 0 : index
    %1 = vector.load %arg2[%c0_1, %c0_2] : memref<128x32xf32, #tpu.memory_space<vmem>>, vector<128x32xf32>
    %c0_3 = arith.constant 0 : index
    %c0_4 = arith.constant 0 : index
    %2 = vector.load %arg3[%c0_3, %c0_4] : memref<520x32xf32, #tpu.memory_space<vmem>>, vector<520x32xf32>
    %cst = arith.constant dense<0.000000e+00> : vector<520x128xf32>
    %3 = tpu.matmul %2, %0, %cst {dimension_numbers = #tpu.dot_dimension_numbers<[1], [1], [0], [0], [0, 0, 1, 0], [], []>} : vector<520x32xf32>, vector<128x32xf32>, vector<520x128xf32> -> vector<520x128xf32>
    %c0_5 = arith.constant 0 : index
    %c0_6 = arith.constant 0 : index
    %4 = vector.load %arg4[%c0_5, %c0_6] : memref<520x32xf32, #tpu.memory_space<vmem>>, vector<520x32xf32>
    %cst_7 = arith.constant dense<0.000000e+00> : vector<520x128xf32>
    %5 = tpu.matmul %4, %1, %cst_7 {dimension_numbers = #tpu.dot_dimension_numbers<[1], [1], [0], [0], [0, 0, 1, 0], [], []>} : vector<520x32xf32>, vector<128x32xf32>, vector<520x128xf32> -> vector<520x128xf32>
    %6 = arith.addf %3, %5 : vector<520x128xf32>
    %7 = vector.extract_strided_slice %6 {offsets = [0, 0], sizes = [256, 128], strides = [1, 1]} : vector<520x128xf32> to vector<256x128xf32>
    %8 = vector.extract_strided_slice %6 {offsets = [256, 0], sizes = [256, 128], strides = [1, 1]} : vector<520x128xf32> to vector<256x128xf32>
    %9 = arith.mulf %7, %8 : vector<256x128xf32>
    %c0_8 = arith.constant 0 : index
    %c0_9 = arith.constant 0 : index
    %10 = vector.load %arg5[%c0_8, %c0_9] : memref<8x256xf32, #tpu.memory_space<vmem>>, vector<8x256xf32>
    %cst_10 = arith.constant dense<0.000000e+00> : vector<8x128xf32>
    %11 = tpu.matmul %10, %9, %cst_10 {dimension_numbers = #tpu.dot_dimension_numbers<[1], [0], [0], [1], [0, 0, 1, 1], [], []>} : vector<8x256xf32>, vector<256x128xf32>, vector<8x128xf32> -> vector<8x128xf32>
    %12 = vector.extract_strided_slice %6 {offsets = [512, 0], sizes = [8, 128], strides = [1, 1]} : vector<520x128xf32> to vector<8x128xf32>
    %13 = arith.addf %11, %12 : vector<8x128xf32>
    %c0_11 = arith.constant 0 : index
    %c0_12 = arith.constant 0 : index
    %14 = vector.load %arg6[%c0_11, %c0_12] : memref<8x1xf32, #tpu.memory_space<vmem>>, vector<8x1xf32>
    %15 = vector.broadcast %14 : vector<8x1xf32> to vector<8x128xf32>
    %16 = arith.addf %13, %15 : vector<8x128xf32>
    %c0_13 = arith.constant 0 : index
    %c0_14 = arith.constant 0 : index
    %17 = vector.load %arg7[%c0_13, %c0_14] : memref<8x128xf32, #tpu.memory_space<vmem>>, vector<8x128xf32>
    tpu.vector_store %arg7[%c0_13, %c0_14], %16 {strides = array<i32>} : memref<8x128xf32, #tpu.memory_space<vmem>>, vector<8x128xf32>,
    return
  }
  func.func @transform_0(%arg0: i32) -> (i32, i32) {
    %c0_i32 = arith.constant 0 : i32
    %c0_i32_0 = arith.constant 0 : i32
    return %arg0, %c0_i32 : i32, i32
  }
  func.func @transform_1(%arg0: i32) -> (i32, i32) {
    %c0_i32 = arith.constant 0 : i32
    %c0_i32_0 = arith.constant 0 : i32
    return %arg0, %c0_i32 : i32, i32
  }
  func.func @transform_2(%arg0: i32) -> (i32, i32) {
    %c0_i32 = arith.constant 0 : i32
    %c0_i32_0 = arith.constant 0 : i32
    %c0_i32_1 = arith.constant 0 : i32
    return %c0_i32, %c0_i32_0 : i32, i32
  }
  func.func @transform_3(%arg0: i32) -> (i32, i32) {
    %c0_i32 = arith.constant 0 : i32
    %c0_i32_0 = arith.constant 0 : i32
    %c0_i32_1 = arith.constant 0 : i32
    return %c0_i32, %c0_i32_0 : i32, i32
  }
  func.func @transform_4(%arg0: i32) -> (i32, i32) {
    %c0_i32 = arith.constant 0 : i32
    %c0_i32_0 = arith.constant 0 : i32
    %c0_i32_1 = arith.constant 0 : i32
    return %c0_i32, %c0_i32_0 : i32, i32
  }
  func.func @transform_5(%arg0: i32) -> (i32, i32) {
    %c0_i32 = arith.constant 0 : i32
    %c0_i32_0 = arith.constant 0 : i32
    %c0_i32_1 = arith.constant 0 : i32
    return %c0_i32, %c0_i32_0 : i32, i32
  }
  func.func @transform_6(%arg0: i32) -> (i32, i32) {
    %c0_i32 = arith.constant 0 : i32
    %c0_i32_0 = arith.constant 0 : i32
    return %c0_i32, %arg0 : i32, i32
  }
}

</mosaic_0001>

<llo_original>
// kernel: tpu_custom_call.1
$region0: #{tpu_custom_call.1}
  #allocation0 [shape = 'u32[]', space=smem, size = 0x4, offset = 0x4, fixed_abs, tag = 'smem constant byte address 0x4 - core index']
  #allocation1 [shape = 'u32[144,128]{1,0:T(1,128)}', space=vmem, size = 0x12000, scoped, tag = 'internal scratch']
  %s0 = inlined_call_operand.vmem [shape: f32[128,32], index: 0, kind: input, shape index: {}]
  %s1 = inlined_call_operand.vmem [shape: f32[128,32], index: 1, kind: input, shape index: {}]
  %s2 = inlined_call_operand.vmem [shape: f32[520,32], index: 2, kind: input, shape index: {}]
  %s3 = inlined_call_operand.vmem [shape: f32[520,32], index: 3, kind: input, shape index: {}]
  %s4 = inlined_call_operand.vmem [shape: f32[8,256], index: 4, kind: input, shape index: {}]
  %s5 = inlined_call_operand.vmem [shape: f32[8,1], index: 5, kind: input, shape index: {}]
  %s6 = inlined_call_operand.hbm [shape: f32[8,128], index: 6, kind: output, shape index: {}]
  %s7 = sld [smem:[#allocation0]]
  $region34: #{tpu_custom_call.1} parent=0
    _
  %s9 = ssub.s32 1, %s7
  %s10 = scalar_select 0, %s9, %s7
  $region1: #{tpu_custom_call.1} parent=0
    #allocation2 [shape = 'u8[4096]{0}', space=vmem, size = 0x1000, scoped, tag = 'output window, operand 0, single buffered']
    #allocation3 [shape = 's32[1]{0}', space=sflag, size = 0x4, scoped, tag = 'scoped memory for tpu_custom_call.1']
    %11 = vsyncpa [#allocation3], 0
    // Predicated region
    $region2: #{tpu_custom_call.1} parent=1 // pred_check
      _
    $region3: #{tpu_custom_call.1} parent=1 // pred_check_branch
      %13 = sbr.rel (0) target = $region5
    $region4: #{tpu_custom_call.1} parent=1 // pred_region
      _
    $region5: #{tpu_custom_call.1} parent=1 // pred_fallthru
      _
    // Predicated region
    $region6: #{tpu_custom_call.1} parent=1 // pred_check
      _
    $region7: #{tpu_custom_call.1} parent=1 // pred_check_branch
      %15 = sbr.rel (0) target = $region9
    $region8: #{tpu_custom_call.1} parent=1 // pred_region
      _
    $region9: #{tpu_custom_call.1} parent=1 // pred_fallthru
      _
    // Predicated region
    $region10: #{tpu_custom_call.1} parent=1 // pred_check
      _
    $region11: #{tpu_custom_call.1} parent=1 // pred_check_branch
      %17 = sbr.rel (0) target = $region13
    $region12: #{tpu_custom_call.1} parent=1 // pred_region
      _
    $region13: #{tpu_custom_call.1} parent=1 // pred_fallthru
      _
    // Predicated region
    $region14: #{tpu_custom_call.1} parent=1 // pred_check
      _
    $region15: #{tpu_custom_call.1} parent=1 // pred_check_branch
      %19 = sbr.rel (0) target = $region17
    $region16: #{tpu_custom_call.1} parent=1 // pred_region
      _
    $region17: #{tpu_custom_call.1} parent=1 // pred_fallthru
      _
    // Predicated region
    $region18: #{tpu_custom_call.1} parent=1 // pred_check
      _
    $region19: #{tpu_custom_call.1} parent=1 // pred_check_branch
      %21 = sbr.rel (0) target = $region21
    $region20: #{tpu_custom_call.1} parent=1 // pred_region
      _
    $region21: #{tpu_custom_call.1} parent=1 // pred_fallthru
      _
    // Predicated region
    $region22: #{tpu_custom_call.1} parent=1 // pred_check
      _
    $region23: #{tpu_custom_call.1} parent=1 // pred_check_branch
      %23 = sbr.rel (0) target = $region25
    $region24: #{tpu_custom_call.1} parent=1 // pred_region
      _
    $region25: #{tpu_custom_call.1} parent=1 // pred_fallthru
      _
    %v24 = vld [vmem:[%s0] sm:$0xff]
    %v25 = vld [vmem:[%s0 + $0x8] sm:$0xff]
    %v26 = vld [vmem:[%s0 + $0x10] sm:$0xff]
    %v27 = vld [vmem:[%s0 + $0x18] sm:$0xff]
    %v28 = vld [vmem:[%s0 + $0x20] sm:$0xff]
    %v29 = vld [vmem:[%s0 + $0x28] sm:$0xff]
    %v30 = vld [vmem:[%s0 + $0x30] sm:$0xff]
    %v31 = vld [vmem:[%s0 + $0x38] sm:$0xff]
    %v32 = vld [vmem:[%s0 + $0x40] sm:$0xff]
    %v33 = vld [vmem:[%s0 + $0x48] sm:$0xff]
    %v34 = vld [vmem:[%s0 + $0x50] sm:$0xff]
    %v35 = vld [vmem:[%s0 + $0x58] sm:$0xff]
    %v36 = vld [vmem:[%s0 + $0x60] sm:$0xff]
    %v37 = vld [vmem:[%s0 + $0x68] sm:$0xff]
    %v38 = vld [vmem:[%s0 + $0x70] sm:$0xff]
    %v39 = vld [vmem:[%s0 + $0x78] sm:$0xff]
    %v40 = vld [vmem:[%s1] sm:$0xff]
    %v41 = vld [vmem:[%s1 + $0x8] sm:$0xff]
    %v42 = vld [vmem:[%s1 + $0x10] sm:$0xff]
    %v43 = vld [vmem:[%s1 + $0x18] sm:$0xff]
    %v44 = vld [vmem:[%s1 + $0x20] sm:$0xff]
    %v45 = vld [vmem:[%s1 + $0x28] sm:$0xff]
    %v46 = vld [vmem:[%s1 + $0x30] sm:$0xff]
    %v47 = vld [vmem:[%s1 + $0x38] sm:$0xff]
    %v48 = vld [vmem:[%s1 + $0x40] sm:$0xff]
    %v49 = vld [vmem:[%s1 + $0x48] sm:$0xff]
    %v50 = vld [vmem:[%s1 + $0x50] sm:$0xff]
    %v51 = vld [vmem:[%s1 + $0x58] sm:$0xff]
    %v52 = vld [vmem:[%s1 + $0x60] sm:$0xff]
    %v53 = vld [vmem:[%s1 + $0x68] sm:$0xff]
    %v54 = vld [vmem:[%s1 + $0x70] sm:$0xff]
    %v55 = vld [vmem:[%s1 + $0x78] sm:$0xff]
    %v56 = vld [vmem:[%s2] sm:$0xff]
    %v57 = vld [vmem:[%s2 + $0x8] sm:$0xff]
    %v58 = vld [vmem:[%s2 + $0x10] sm:$0xff]
    %v59 = vld [vmem:[%s2 + $0x18] sm:$0xff]
    %v60 = vld [vmem:[%s2 + $0x20] sm:$0xff]
    %v61 = vld [vmem:[%s2 + $0x28] sm:$0xff]
    %v62 = vld [vmem:[%s2 + $0x30] sm:$0xff]
    %v63 = vld [vmem:[%s2 + $0x38] sm:$0xff]
    %v64 = vld [vmem:[%s2 + $0x40] sm:$0xff]
    %v65 = vld [vmem:[%s2 + $0x48] sm:$0xff]
    %v66 = vld [vmem:[%s2 + $0x50] sm:$0xff]
    %v67 = vld [vmem:[%s2 + $0x58] sm:$0xff]
    %v68 = vld [vmem:[%s2 + $0x60] sm:$0xff]
    %v69 = vld [vmem:[%s2 + $0x68] sm:$0xff]
    %v70 = vld [vmem:[%s2 + $0x70] sm:$0xff]
    %v71 = vld [vmem:[%s2 + $0x78] sm:$0xff]
    %v72 = vld [vmem:[%s2 + $0x80] sm:$0xff]
    %v73 = vld [vmem:[%s2 + $0x88] sm:$0xff]
    %v74 = vld [vmem:[%s2 + $0x90] sm:$0xff]
    %v75 = vld [vmem:[%s2 + $0x98] sm:$0xff]
    %v76 = vld [vmem:[%s2 + $0xa0] sm:$0xff]
    %v77 = vld [vmem:[%s2 + $0xa8] sm:$0xff]
    %v78 = vld [vmem:[%s2 + $0xb0] sm:$0xff]
    %v79 = vld [vmem:[%s2 + $0xb8] sm:$0xff]
    %v80 = vld [vmem:[%s2 + $0xc0] sm:$0xff]
    %v81 = vld [vmem:[%s2 + $0xc8] sm:$0xff]
    %v82 = vld [vmem:[%s2 + $0xd0] sm:$0xff]
    %v83 = vld [vmem:[%s2 + $0xd8] sm:$0xff]
    %v84 = vld [vmem:[%s2 + $0xe0] sm:$0xff]
    %v85 = vld [vmem:[%s2 + $0xe8] sm:$0xff]
    %v86 = vld [vmem:[%s2 + $0xf0] sm:$0xff]
    %v87 = vld [vmem:[%s2 + $0xf8] sm:$0xff]
    %v88 = vld [vmem:[%s2 + $0x100] sm:$0xff]
    %v89 = vld [vmem:[%s2 + $0x108] sm:$0xff]
    %v90 = vld [vmem:[%s2 + $0x110] sm:$0xff]
    %v91 = vld [vmem:[%s2 + $0x118] sm:$0xff]
    %v92 = vld [vmem:[%s2 + $0x120] sm:$0xff]
    %v93 = vld [vmem:[%s2 + $0x128] sm:$0xff]
    %v94 = vld [vmem:[%s2 + $0x130] sm:$0xff]
    %v95 = vld [vmem:[%s2 + $0x138] sm:$0xff]
    %v96 = vld [vmem:[%s2 + $0x140] sm:$0xff]
    %v97 = vld [vmem:[%s2 + $0x148] sm:$0xff]
    %v98 = vld [vmem:[%s2 + $0x150] sm:$0xff]
    %v99 = vld [vmem:[%s2 + $0x158] sm:$0xff]
    %v100 = vld [vmem:[%s2 + $0x160] sm:$0xff]
    %v101 = vld [vmem:[%s2 + $0x168] sm:$0xff]
    %v102 = vld [vmem:[%s2 + $0x170] sm:$0xff]
    %v103 = vld [vmem:[%s2 + $0x178] sm:$0xff]
    %v104 = vld [vmem:[%s2 + $0x180] sm:$0xff]
    %v105 = vld [vmem:[%s2 + $0x188] sm:$0xff]
    %v106 = vld [vmem:[%s2 + $0x190] sm:$0xff]
    %v107 = vld [vmem:[%s2 + $0x198] sm:$0xff]
    %v108 = vld [vmem:[%s2 + $0x1a0] sm:$0xff]
    %v109 = vld [vmem:[%s2 + $0x1a8] sm:$0xff]
    %v110 = vld [vmem:[%s2 + $0x1b0] sm:$0xff]
    %v111 = vld [vmem:[%s2 + $0x1b8] sm:$0xff]
    %v112 = vld [vmem:[%s2 + $0x1c0] sm:$0xff]
    %v113 = vld [vmem:[%s2 + $0x1c8] sm:$0xff]
    %v114 = vld [vmem:[%s2 + $0x1d0] sm:$0xff]
    %v115 = vld [vmem:[%s2 + $0x1d8] sm:$0xff]
    %v116 = vld [vmem:[%s2 + $0x1e0] sm:$0xff]
    %v117 = vld [vmem:[%s2 + $0x1e8] sm:$0xff]
    %v118 = vld [vmem:[%s2 + $0x1f0] sm:$0xff]
    %v119 = vld [vmem:[%s2 + $0x1f8] sm:$0xff]
    %v120 = vld [vmem:[%s2 + $0x200] sm:$0xff]
    %v121 = vld [vmem:[%s3] sm:$0xff]
    %v122 = vld [vmem:[%s3 + $0x8] sm:$0xff]
    %v123 = vld [vmem:[%s3 + $0x10] sm:$0xff]
    %v124 = vld [vmem:[%s3 + $0x18] sm:$0xff]
    %v125 = vld [vmem:[%s3 + $0x20] sm:$0xff]
    %v126 = vld [vmem:[%s3 + $0x28] sm:$0xff]
    %v127 = vld [vmem:[%s3 + $0x30] sm:$0xff]
    %v128 = vld [vmem:[%s3 + $0x38] sm:$0xff]
    %v129 = vld [vmem:[%s3 + $0x40] sm:$0xff]
    %v130 = vld [vmem:[%s3 + $0x48] sm:$0xff]
    %v131 = vld [vmem:[%s3 + $0x50] sm:$0xff]
    %v132 = vld [vmem:[%s3 + $0x58] sm:$0xff]
    %v133 = vld [vmem:[%s3 + $0x60] sm:$0xff]
    %v134 = vld [vmem:[%s3 + $0x68] sm:$0xff]
    %v135 = vld [vmem:[%s3 + $0x70] sm:$0xff]
    %v136 = vld [vmem:[%s3 + $0x78] sm:$0xff]
    %v137 = vld [vmem:[%s3 + $0x80] sm:$0xff]
    %v138 = vld [vmem:[%s3 + $0x88] sm:$0xff]
    %v139 = vld [vmem:[%s3 + $0x90] sm:$0xff]
    %v140 = vld [vmem:[%s3 + $0x98] sm:$0xff]
    %v141 = vld [vmem:[%s3 + $0xa0] sm:$0xff]
    %v142 = vld [vmem:[%s3 + $0xa8] sm:$0xff]
    %v143 = vld [vmem:[%s3 + $0xb0] sm:$0xff]
    %v144 = vld [vmem:[%s3 + $0xb8] sm:$0xff]
    %v145 = vld [vmem:[%s3 + $0xc0] sm:$0xff]
    %v146 = vld [vmem:[%s3 + $0xc8] sm:$0xff]
    %v147 = vld [vmem:[%s3 + $0xd0] sm:$0xff]
    %v148 = vld [vmem:[%s3 + $0xd8] sm:$0xff]
    %v149 = vld [vmem:[%s3 + $0xe0] sm:$0xff]
    %v150 = vld [vmem:[%s3 + $0xe8] sm:$0xff]
    %v151 = vld [vmem:[%s3 + $0xf0] sm:$0xff]
    %v152 = vld [vmem:[%s3 + $0xf8] sm:$0xff]
    %v153 = vld [vmem:[%s3 + $0x100] sm:$0xff]
    %v154 = vld [vmem:[%s3 + $0x108] sm:$0xff]
    %v155 = vld [vmem:[%s3 + $0x110] sm:$0xff]
    %v156 = vld [vmem:[%s3 + $0x118] sm:$0xff]
    %v157 = vld [vmem:[%s3 + $0x120] sm:$0xff]
    %v158 = vld [vmem:[%s3 + $0x128] sm:$0xff]
    %v159 = vld [vmem:[%s3 + $0x130] sm:$0xff]
    %v160 = vld [vmem:[%s3 + $0x138] sm:$0xff]
    %v161 = vld [vmem:[%s3 + $0x140] sm:$0xff]
    %v162 = vld [vmem:[%s3 + $0x148] sm:$0xff]
    %v163 = vld [vmem:[%s3 + $0x150] sm:$0xff]
    %v164 = vld [vmem:[%s3 + $0x158] sm:$0xff]
    %v165 = vld [vmem:[%s3 + $0x160] sm:$0xff]
    %v166 = vld [vmem:[%s3 + $0x168] sm:$0xff]
    %v167 = vld [vmem:[%s3 + $0x170] sm:$0xff]
    %v168 = vld [vmem:[%s3 + $0x178] sm:$0xff]
    %v169 = vld [vmem:[%s3 + $0x180] sm:$0xff]
    %v170 = vld [vmem:[%s3 + $0x188] sm:$0xff]
    %v171 = vld [vmem:[%s3 + $0x190] sm:$0xff]
    %v172 = vld [vmem:[%s3 + $0x198] sm:$0xff]
    %v173 = vld [vmem:[%s3 + $0x1a0] sm:$0xff]
    %v174 = vld [vmem:[%s3 + $0x1a8] sm:$0xff]
    %v175 = vld [vmem:[%s3 + $0x1b0] sm:$0xff]
    %v176 = vld [vmem:[%s3 + $0x1b8] sm:$0xff]
    %v177 = vld [vmem:[%s3 + $0x1c0] sm:$0xff]
    %v178 = vld [vmem:[%s3 + $0x1c8] sm:$0xff]
    %v179 = vld [vmem:[%s3 + $0x1d0] sm:$0xff]
    %v180 = vld [vmem:[%s3 + $0x1d8] sm:$0xff]
    %v181 = vld [vmem:[%s3 + $0x1e0] sm:$0xff]
    %v182 = vld [vmem:[%s3 + $0x1e8] sm:$0xff]
    %v183 = vld [vmem:[%s3 + $0x1f0] sm:$0xff]
    %v184 = vld [vmem:[%s3 + $0x1f8] sm:$0xff]
    %v185 = vld [vmem:[%s3 + $0x200] sm:$0xff]
    %vm186 = vcmask 261120
    %v188 = vsel %vm186, %v121, 0
    %v191 = vsel %vm186, %v122, 0
    %v194 = vsel %vm186, %v123, 0
    %v197 = vsel %vm186, %v124, 0
    %v200 = vsel %vm186, %v125, 0
    %v203 = vsel %vm186, %v126, 0
    %v206 = vsel %vm186, %v127, 0
    %v209 = vsel %vm186, %v128, 0
    %v212 = vsel %vm186, %v129, 0
    %v215 = vsel %vm186, %v130, 0
    %v218 = vsel %vm186, %v131, 0
    %v221 = vsel %vm186, %v132, 0
    %v224 = vsel %vm186, %v133, 0
    %v227 = vsel %vm186, %v134, 0
    %v230 = vsel %vm186, %v135, 0
    %v233 = vsel %vm186, %v136, 0
    %v236 = vsel %vm186, %v137, 0
    %v239 = vsel %vm186, %v138, 0
    %v242 = vsel %vm186, %v139, 0
    %v245 = vsel %vm186, %v140, 0
    %v248 = vsel %vm186, %v141, 0
    %v251 = vsel %vm186, %v142, 0
    %v254 = vsel %vm186, %v143, 0
    %v257 = vsel %vm186, %v144, 0
    %v260 = vsel %vm186, %v145, 0
    %v263 = vsel %vm186, %v146, 0
    %v266 = vsel %vm186, %v147, 0
    %v269 = vsel %vm186, %v148, 0
    %v272 = vsel %vm186, %v149, 0
    %v275 = vsel %vm186, %v150, 0
    %v278 = vsel %vm186, %v151, 0
    %v281 = vsel %vm186, %v152, 0
    %v284 = vsel %vm186, %v153, 0
    %v287 = vsel %vm186, %v154, 0
    %v290 = vsel %vm186, %v155, 0
    %v293 = vsel %vm186, %v156, 0
    %v296 = vsel %vm186, %v157, 0
    %v299 = vsel %vm186, %v158, 0
    %v302 = vsel %vm186, %v159, 0
    %v305 = vsel %vm186, %v160, 0
    %v308 = vsel %vm186, %v161, 0
    %v311 = vsel %vm186, %v162, 0
    %v314 = vsel %vm186, %v163, 0
    %v317 = vsel %vm186, %v164, 0
    %v320 = vsel %vm186, %v165, 0
    %v323 = vsel %vm186, %v166, 0
    %v326 = vsel %vm186, %v167, 0
    %v329 = vsel %vm186, %v168, 0
    %v332 = vsel %vm186, %v169, 0
    %v335 = vsel %vm186, %v170, 0
    %v338 = vsel %vm186, %v171, 0
    %v341 = vsel %vm186, %v172, 0
    %v344 = vsel %vm186, %v173, 0
    %v347 = vsel %vm186, %v174, 0
    %v350 = vsel %vm186, %v175, 0
    %v353 = vsel %vm186, %v176, 0
    %v356 = vsel %vm186, %v177, 0
    %v359 = vsel %vm186, %v178, 0
    %v362 = vsel %vm186, %v179, 0
    %v365 = vsel %vm186, %v180, 0
    %v368 = vsel %vm186, %v181, 0
    %v371 = vsel %vm186, %v182, 0
    %v374 = vsel %vm186, %v183, 0
    %v377 = vsel %vm186, %v184, 0
    %v380 = vsel %vm186, %v185, 0
    %v383 = vsel %vm186, %v40, 0
    %v386 = vsel %vm186, %v41, 0
    %v389 = vsel %vm186, %v42, 0
    %v392 = vsel %vm186, %v43, 0
    %v395 = vsel %vm186, %v44, 0
    %v398 = vsel %vm186, %v45, 0
    %v401 = vsel %vm186, %v46, 0
    %v404 = vsel %vm186, %v47, 0
    %v407 = vsel %vm186, %v48, 0
    %v410 = vsel %vm186, %v49, 0
    %v413 = vsel %vm186, %v50, 0
    %v416 = vsel %vm186, %v51, 0
    %v419 = vsel %vm186, %v52, 0
    %v422 = vsel %vm186, %v53, 0
    %v425 = vsel %vm186, %v54, 0
    %v428 = vsel %vm186, %v55, 0
    %430 = vmatprep.subr.mxu0 0.0
    %431 = vmatpush1.xpose.msra.mxu0 %v383
    %432 = vmatprep.subr.mxu0 0.0
    %433 = vmatpush1.xpose.msra.mxu0 %v386
    %434 = vmatprep.subr.mxu0 0.0
    %435 = vmatpush1.xpose.msra.mxu0 %v389
    %436 = vmatprep.subr.mxu0 0.0
    %437 = vmatpush1.xpose.msra.mxu0 %v392
    %438 = vmatprep.subr.mxu0 0.0
    %439 = vmatpush1.xpose.msra.mxu0 %v395
    %440 = vmatprep.subr.mxu0 0.0
    %441 = vmatpush1.xpose.msra.mxu0 %v398
    %442 = vmatprep.subr.mxu0 0.0
    %443 = vmatpush1.xpose.msra.mxu0 %v401
    %444 = vmatprep.subr.mxu0 0.0
    %445 = vmatpush1.xpose.msra.mxu0 %v404
    %446 = vmatprep.subr.mxu0 0.0
    %447 = vmatpush1.xpose.msra.mxu0 %v407
    %448 = vmatprep.subr.mxu0 0.0
    %449 = vmatpush1.xpose.msra.mxu0 %v410
    %450 = vmatprep.subr.mxu0 0.0
    %451 = vmatpush1.xpose.msra.mxu0 %v413
    %452 = vmatprep.subr.mxu0 0.0
    %453 = vmatpush1.xpose.msra.mxu0 %v416
    %454 = vmatprep.subr.mxu0 0.0
    %455 = vmatpush1.xpose.msra.mxu0 %v419
    %456 = vmatprep.subr.mxu0 0.0
    %457 = vmatpush1.xpose.msra.mxu0 %v422
    %458 = vmatprep.subr.mxu0 0.0
    %459 = vmatpush1.xpose.msra.mxu0 %v425
    %460 = vmatprep.subr.mxu0 0.0
    %461 = vmatpush1.xpose.msra.mxu0 %v428
    %462 = vmatprep.subr.mxu0 0.0
    %463 = vmatpush1.xpose.msra.mxu0 0.0
    %464 = vmatprep.subr.mxu0 0.0
    %465 = vmatpush1.xpose.msra.mxu0 0.0
    %466 = vmatprep.subr.mxu0 0.0
    %467 = vmatpush1.xpose.msra.mxu0 0.0
    %468 = vmatprep.subr.mxu0 0.0
    %469 = vmatpush1.xpose.msra.mxu0 0.0
    %470 = vmatprep.subr.mxu0 0.0
    %471 = vmatpush1.xpose.msra.mxu0 0.0
    %472 = vmatprep.subr.mxu0 0.0
    %473 = vmatpush1.xpose.msra.mxu0 0.0
    %474 = vmatprep.subr.mxu0 0.0
    %475 = vmatpush1.xpose.msra.mxu0 0.0
    %476 = vmatprep.subr.mxu0 0.0
    %477 = vmatpush1.xpose.msra.mxu0 0.0
    %478 = vmatprep.subr.mxu0 0.0
    %479 = vmatpush1.xpose.msra.mxu0 0.0
    %480 = vmatprep.subr.mxu0 0.0
    %481 = vmatpush1.xpose.msra.mxu0 0.0
    %482 = vmatprep.subr.mxu0 0.0
    %483 = vmatpush1.xpose.msra.mxu0 0.0
    %484 = vmatprep.subr.mxu0 0.0
    %485 = vmatpush1.xpose.msra.mxu0 0.0
    %486 = vmatprep.subr.mxu0 0.0
    %487 = vmatpush1.xpose.msra.mxu0 0.0
    %488 = vmatprep.subr.mxu0 0.0
    %489 = vmatpush1.xpose.msra.mxu0 0.0
    %490 = vmatprep.subr.mxu0 0.0
    %491 = vmatpush1.xpose.msra.mxu0 0.0
    %492 = vmatprep.subr.mxu0 0.0
    %493 = vmatpush1.xpose.msra.mxu0 0.0
    %494 = vmatprep.mubr.f32.mxu0 0.0
    %495 = vmatmul.mubr.f32.gmra.mrb[0].mxu0 %v188
    %v496 = vpop.f32.mrb[0].mxu0
    %v497 = vadd.f32 0.0, %v496
    %v498 = vpop.f32.mrb[0].mxu0
    %499 = vmatprep.mubr.f32.mxu0 0.0
    %500 = vmatmul.mubr.f32.gmra.mrb[0].mxu0 %v191
    %v501 = vpop.f32.mrb[0].mxu0
    %v502 = vadd.f32 0.0, %v501
    %v503 = vpop.f32.mrb[0].mxu0
    %504 = vmatprep.mubr.f32.mxu0 0.0
    %505 = vmatmul.mubr.f32.gmra.mrb[0].mxu0 %v194
    %v506 = vpop.f32.mrb[0].mxu0
    %v507 = vadd.f32 0.0, %v506
    %v508 = vpop.f32.mrb[0].mxu0
    %509 = vmatprep.mubr.f32.mxu0 0.0
    %510 = vmatmul.mubr.f32.gmra.mrb[0].mxu0 %v197
    %v511 = vpop.f32.mrb[0].mxu0
    %v512 = vadd.f32 0.0, %v511
    %v513 = vpop.f32.mrb[0].mxu0
    %514 = vmatprep.mubr.f32.mxu0 0.0
    %515 = vmatmul.mubr.f32.gmra.mrb[0].mxu0 %v200
    %v516 = vpop.f32.mrb[0].mxu0
    %v517 = vadd.f32 0.0, %v516
    %v518 = vpop.f32.mrb[0].mxu0
    %519 = vmatprep.mubr.f32.mxu0 0.0
    %520 = vmatmul.mubr.f32.gmra.mrb[0].mxu0 %v203
    %v521 = vpop.f32.mrb[0].mxu0
    %v522 = vadd.f32 0.0, %v521
    %v523 = vpop.f32.mrb[0].mxu0
    %524 = vmatprep.mubr.f32.mxu0 0.0
    %525 = vmatmul.mubr.f32.gmra.mrb[0].mxu0 %v206
    %v526 = vpop.f32.mrb[0].mxu0
    %v527 = vadd.f32 0.0, %v526
    %v528 = vpop.f32.mrb[0].mxu0
    %529 = vmatprep.mubr.f32.mxu0 0.0
    %530 = vmatmul.mubr.f32.gmra.mrb[0].mxu0 %v209
    %v531 = vpop.f32.mrb[0].mxu0
    %v532 = vadd.f32 0.0, %v531
    %v533 = vpop.f32.mrb[0].mxu0
    %534 = vmatprep.mubr.f32.mxu0 0.0
    %535 = vmatmul.mubr.f32.gmra.mrb[0].mxu0 %v212
    %v536 = vpop.f32.mrb[0].mxu0
    %v537 = vadd.f32 0.0, %v536
    %v538 = vpop.f32.mrb[0].mxu0
    %539 = vmatprep.mubr.f32.mxu0 0.0
    %540 = vmatmul.mubr.f32.gmra.mrb[0].mxu0 %v215
    %v541 = vpop.f32.mrb[0].mxu0
    %v542 = vadd.f32 0.0, %v541
    %v543 = vpop.f32.mrb[0].mxu0
    %544 = vmatprep.mubr.f32.mxu0 0.0
    %545 = vmatmul.mubr.f32.gmra.mrb[0].mxu0 %v218
    %v546 = vpop.f32.mrb[0].mxu0
    %v547 = vadd.f32 0.0, %v546
    %v548 = vpop.f32.mrb[0].mxu0
    %549 = vmatprep.mubr.f32.mxu0 0.0
    %550 = vmatmul.mubr.f32.gmra.mrb[0].mxu0 %v221
    %v551 = vpop.f32.mrb[0].mxu0
    %v552 = vadd.f32 0.0, %v551
    %v553 = vpop.f32.mrb[0].mxu0
    %554 = vmatprep.mubr.f32.mxu0 0.0
    %555 = vmatmul.mubr.f32.gmra.mrb[0].mxu0 %v224
    %v556 = vpop.f32.mrb[0].mxu0
    %v557 = vadd.f32 0.0, %v556
    %v558 = vpop.f32.mrb[0].mxu0
    %559 = vmatprep.mubr.f32.mxu0 0.0
    %560 = vmatmul.mubr.f32.gmra.mrb[0].mxu0 %v227
    %v561 = vpop.f32.mrb[0].mxu0
    %v562 = vadd.f32 0.0, %v561
    %v563 = vpop.f32.mrb[0].mxu0
    %564 = vmatprep.mubr.f32.mxu0 0.0
    %565 = vmatmul.mubr.f32.gmra.mrb[0].mxu0 %v230
    %v566 = vpop.f32.mrb[0].mxu0
    %v567 = vadd.f32 0.0, %v566
    %v568 = vpop.f32.mrb[0].mxu0
    %569 = vmatprep.mubr.f32.mxu0 0.0
    %570 = vmatmul.mubr.f32.gmra.mrb[0].mxu0 %v233
    %v571 = vpop.f32.mrb[0].mxu0
    %v572 = vadd.f32 0.0, %v571
    %v573 = vpop.f32.mrb[0].mxu0
    %574 = vmatprep.mubr.f32.mxu0 0.0
    %575 = vmatmul.mubr.f32.gmra.mrb[0].mxu0 %v236
    %v576 = vpop.f32.mrb[0].mxu0
    %v577 = vadd.f32 0.0, %v576
    %v578 = vpop.f32.mrb[0].mxu0
    %579 = vmatprep.mubr.f32.mxu0 0.0
    %580 = vmatmul.mubr.f32.gmra.mrb[0].mxu0 %v239
    %v581 = vpop.f32.mrb[0].mxu0
    %v582 = vadd.f32 0.0, %v581
    %v583 = vpop.f32.mrb[0].mxu0
    %584 = vmatprep.mubr.f32.mxu0 0.0
    %585 = vmatmul.mubr.f32.gmra.mrb[0].mxu0 %v242
    %v586 = vpop.f32.mrb[0].mxu0
    %v587 = vadd.f32 0.0, %v586
    %v588 = vpop.f32.mrb[0].mxu0
    %589 = vmatprep.mubr.f32.mxu0 0.0
    %590 = vmatmul.mubr.f32.gmra.mrb[0].mxu0 %v245
    %v591 = vpop.f32.mrb[0].mxu0
    %v592 = vadd.f32 0.0, %v591
    %v593 = vpop.f32.mrb[0].mxu0
    %594 = vmatprep.mubr.f32.mxu0 0.0
    %595 = vmatmul.mubr.f32.gmra.mrb[0].mxu0 %v248
    %v596 = vpop.f32.mrb[0].mxu0
    %v597 = vadd.f32 0.0, %v596
    %v598 = vpop.f32.mrb[0].mxu0
    %599 = vmatprep.mubr.f32.mxu0 0.0
    %600 = vmatmul.mubr.f32.gmra.mrb[0].mxu0 %v251
    %v601 = vpop.f32.mrb[0].mxu0
    %v602 = vadd.f32 0.0, %v601
    %v603 = vpop.f32.mrb[0].mxu0
    %604 = vmatprep.mubr.f32.mxu0 0.0
    %605 = vmatmul.mubr.f32.gmra.mrb[0].mxu0 %v254
    %v606 = vpop.f32.mrb[0].mxu0
    %v607 = vadd.f32 0.0, %v606
    %v608 = vpop.f32.mrb[0].mxu0
    %609 = vmatprep.mubr.f32.mxu0 0.0
    %610 = vmatmul.mubr.f32.gmra.mrb[0].mxu0 %v257
    %v611 = vpop.f32.mrb[0].mxu0
    %v612 = vadd.f32 0.0, %v611
    %v613 = vpop.f32.mrb[0].mxu0
    %614 = vmatprep.mubr.f32.mxu0 0.0
    %615 = vmatmul.mubr.f32.gmra.mrb[0].mxu0 %v260
    %v616 = vpop.f32.mrb[0].mxu0
    %v617 = vadd.f32 0.0, %v616
    %v618 = vpop.f32.mrb[0].mxu0
    %619 = vmatprep.mubr.f32.mxu0 0.0
    %620 = vmatmul.mubr.f32.gmra.mrb[0].mxu0 %v263
    %v621 = vpop.f32.mrb[0].mxu0
    %v622 = vadd.f32 0.0, %v621
    %v623 = vpop.f32.mrb[0].mxu0
    %624 = vmatprep.mubr.f32.mxu0 0.0
    %625 = vmatmul.mubr.f32.gmra.mrb[0].mxu0 %v266
    %v626 = vpop.f32.mrb[0].mxu0
    %v627 = vadd.f32 0.0, %v626
    %v628 = vpop.f32.mrb[0].mxu0
    %629 = vmatprep.mubr.f32.mxu0 0.0
    %630 = vmatmul.mubr.f32.gmra.mrb[0].mxu0 %v269
    %v631 = vpop.f32.mrb[0].mxu0
    %v632 = vadd.f32 0.0, %v631
    %v633 = vpop.f32.mrb[0].mxu0
    %634 = vmatprep.mubr.f32.mxu0 0.0
    %635 = vmatmul.mubr.f32.gmra.mrb[0].mxu0 %v272
    %v636 = vpop.f32.mrb[0].mxu0
    %v637 = vadd.f32 0.0, %v636
    %v638 = vpop.f32.mrb[0].mxu0
    %639 = vmatprep.mubr.f32.mxu0 0.0
    %640 = vmatmul.mubr.f32.gmra.mrb[0].mxu0 %v275
    %v641 = vpop.f32.mrb[0].mxu0
    %v642 = vadd.f32 0.0, %v641
    %v643 = vpop.f32.mrb[0].mxu0
    %644 = vmatprep.mubr.f32.mxu0 0.0
    %645 = vmatmul.mubr.f32.gmra.mrb[0].mxu0 %v278
    %v646 = vpop.f32.mrb[0].mxu0
    %v647 = vadd.f32 0.0, %v646
    %v648 = vpop.f32.mrb[0].mxu0
    %649 = vmatprep.mubr.f32.mxu0 0.0
    %650 = vmatmul.mubr.f32.gmra.mrb[0].mxu0 %v281
    %v651 = vpop.f32.mrb[0].mxu0
    %v652 = vadd.f32 0.0, %v651
    %v653 = vpop.f32.mrb[0].mxu0
    %654 = vmatprep.mubr.f32.mxu0 0.0
    %655 = vmatmul.mubr.f32.gmra.mrb[0].mxu0 %v284
    %v656 = vpop.f32.mrb[0].mxu0
    %v657 = vadd.f32 0.0, %v656
    %v658 = vpop.f32.mrb[0].mxu0
    %659 = vmatprep.mubr.f32.mxu0 0.0
    %660 = vmatmul.mubr.f32.gmra.mrb[0].mxu0 %v287
    %v661 = vpop.f32.mrb[0].mxu0
    %v662 = vadd.f32 0.0, %v661
    %v663 = vpop.f32.mrb[0].mxu0
    %664 = vmatprep.mubr.f32.mxu0 0.0
    %665 = vmatmul.mubr.f32.gmra.mrb[0].mxu0 %v290
    %v666 = vpop.f32.mrb[0].mxu0
    %v667 = vadd.f32 0.0, %v666
    %v668 = vpop.f32.mrb[0].mxu0
    %669 = vmatprep.mubr.f32.mxu0 0.0
    %670 = vmatmul.mubr.f32.gmra.mrb[0].mxu0 %v293
    %v671 = vpop.f32.mrb[0].mxu0
    %v672 = vadd.f32 0.0, %v671
    %v673 = vpop.f32.mrb[0].mxu0
    %674 = vmatprep.mubr.f32.mxu0 0.0
    %675 = vmatmul.mubr.f32.gmra.mrb[0].mxu0 %v296
    %v676 = vpop.f32.mrb[0].mxu0
    %v677 = vadd.f32 0.0, %v676
    %v678 = vpop.f32.mrb[0].mxu0
    %679 = vmatprep.mubr.f32.mxu0 0.0
    %680 = vmatmul.mubr.f32.gmra.mrb[0].mxu0 %v299
    %v681 = vpop.f32.mrb[0].mxu0
    %v682 = vadd.f32 0.0, %v681
    %v683 = vpop.f32.mrb[0].mxu0
    %684 = vmatprep.mubr.f32.mxu0 0.0
    %685 = vmatmul.mubr.f32.gmra.mrb[0].mxu0 %v302
    %v686 = vpop.f32.mrb[0].mxu0
    %v687 = vadd.f32 0.0, %v686
    %v688 = vpop.f32.mrb[0].mxu0
    %689 = vmatprep.mubr.f32.mxu0 0.0
    %690 = vmatmul.mubr.f32.gmra.mrb[0].mxu0 %v305
    %v691 = vpop.f32.mrb[0].mxu0
    %v692 = vadd.f32 0.0, %v691
    %v693 = vpop.f32.mrb[0].mxu0
    %694 = vmatprep.mubr.f32.mxu0 0.0
    %695 = vmatmul.mubr.f32.gmra.mrb[0].mxu0 %v308
    %v696 = vpop.f32.mrb[0].mxu0
    %v697 = vadd.f32 0.0, %v696
    %v698 = vpop.f32.mrb[0].mxu0
    %699 = vmatprep.mubr.f32.mxu0 0.0
    %700 = vmatmul.mubr.f32.gmra.mrb[0].mxu0 %v311
    %v701 = vpop.f32.mrb[0].mxu0
    %v702 = vadd.f32 0.0, %v701
    %v703 = vpop.f32.mrb[0].mxu0
    %704 = vmatprep.mubr.f32.mxu0 0.0
    %705 = vmatmul.mubr.f32.gmra.mrb[0].mxu0 %v314
    %v706 = vpop.f32.mrb[0].mxu0
    %v707 = vadd.f32 0.0, %v706
    %v708 = vpop.f32.mrb[0].mxu0
    %709 = vmatprep.mubr.f32.mxu0 0.0
    %710 = vmatmul.mubr.f32.gmra.mrb[0].mxu0 %v317
    %v711 = vpop.f32.mrb[0].mxu0
    %v712 = vadd.f32 0.0, %v711
    %v713 = vpop.f32.mrb[0].mxu0
    %714 = vmatprep.mubr.f32.mxu0 0.0
    %715 = vmatmul.mubr.f32.gmra.mrb[0].mxu0 %v320
    %v716 = vpop.f32.mrb[0].mxu0
    %v717 = vadd.f32 0.0, %v716
    %v718 = vpop.f32.mrb[0].mxu0
    %719 = vmatprep.mubr.f32.mxu0 0.0
    %720 = vmatmul.mubr.f32.gmra.mrb[0].mxu0 %v323
    %v721 = vpop.f32.mrb[0].mxu0
    %v722 = vadd.f32 0.0, %v721
    %v723 = vpop.f32.mrb[0].mxu0
    %724 = vmatprep.mubr.f32.mxu0 0.0
    %725 = vmatmul.mubr.f32.gmra.mrb[0].mxu0 %v326
    %v726 = vpop.f32.mrb[0].mxu0
    %v727 = vadd.f32 0.0, %v726
    %v728 = vpop.f32.mrb[0].mxu0
    %729 = vmatprep.mubr.f32.mxu0 0.0
    %730 = vmatmul.mubr.f32.gmra.mrb[0].mxu0 %v329
    %v731 = vpop.f32.mrb[0].mxu0
    %v732 = vadd.f32 0.0, %v731
    %v733 = vpop.f32.mrb[0].mxu0
    %734 = vmatprep.mubr.f32.mxu0 0.0
    %735 = vmatmul.mubr.f32.gmra.mrb[0].mxu0 %v332
    %v736 = vpop.f32.mrb[0].mxu0
    %v737 = vadd.f32 0.0, %v736
    %v738 = vpop.f32.mrb[0].mxu0
    %739 = vmatprep.mubr.f32.mxu0 0.0
    %740 = vmatmul.mubr.f32.gmra.mrb[0].mxu0 %v335
    %v741 = vpop.f32.mrb[0].mxu0
    %v742 = vadd.f32 0.0, %v741
    %v743 = vpop.f32.mrb[0].mxu0
    %744 = vmatprep.mubr.f32.mxu0 0.0
    %745 = vmatmul.mubr.f32.gmra.mrb[0].mxu0 %v338
    %v746 = vpop.f32.mrb[0].mxu0
    %v747 = vadd.f32 0.0, %v746
    %v748 = vpop.f32.mrb[0].mxu0
    %749 = vmatprep.mubr.f32.mxu0 0.0
    %750 = vmatmul.mubr.f32.gmra.mrb[0].mxu0 %v341
    %v751 = vpop.f32.mrb[0].mxu0
    %v752 = vadd.f32 0.0, %v751
    %v753 = vpop.f32.mrb[0].mxu0
    %754 = vmatprep.mubr.f32.mxu0 0.0
    %755 = vmatmul.mubr.f32.gmra.mrb[0].mxu0 %v344
    %v756 = vpop.f32.mrb[0].mxu0
    %v757 = vadd.f32 0.0, %v756
    %v758 = vpop.f32.mrb[0].mxu0
    %759 = vmatprep.mubr.f32.mxu0 0.0
    %760 = vmatmul.mubr.f32.gmra.mrb[0].mxu0 %v347
    %v761 = vpop.f32.mrb[0].mxu0
    %v762 = vadd.f32 0.0, %v761
    %v763 = vpop.f32.mrb[0].mxu0
    %764 = vmatprep.mubr.f32.mxu0 0.0
    %765 = vmatmul.mubr.f32.gmra.mrb[0].mxu0 %v350
    %v766 = vpop.f32.mrb[0].mxu0
    %v767 = vadd.f32 0.0, %v766
    %v768 = vpop.f32.mrb[0].mxu0
    %769 = vmatprep.mubr.f32.mxu0 0.0
    %770 = vmatmul.mubr.f32.gmra.mrb[0].mxu0 %v353
    %v771 = vpop.f32.mrb[0].mxu0
    %v772 = vadd.f32 0.0, %v771
    %v773 = vpop.f32.mrb[0].mxu0
    %774 = vmatprep.mubr.f32.mxu0 0.0
    %775 = vmatmul.mubr.f32.gmra.mrb[0].mxu0 %v356
    %v776 = vpop.f32.mrb[0].mxu0
    %v777 = vadd.f32 0.0, %v776
    %v778 = vpop.f32.mrb[0].mxu0
    %779 = vmatprep.mubr.f32.mxu0 0.0
    %780 = vmatmul.mubr.f32.gmra.mrb[0].mxu0 %v359
    %v781 = vpop.f32.mrb[0].mxu0
    %v782 = vadd.f32 0.0, %v781
    %v783 = vpop.f32.mrb[0].mxu0
    %784 = vmatprep.mubr.f32.mxu0 0.0
    %785 = vmatmul.mubr.f32.gmra.mrb[0].mxu0 %v362
    %v786 = vpop.f32.mrb[0].mxu0
    %v787 = vadd.f32 0.0, %v786
    %v788 = vpop.f32.mrb[0].mxu0
    %789 = vmatprep.mubr.f32.mxu0 0.0
    %790 = vmatmul.mubr.f32.gmra.mrb[0].mxu0 %v365
    %v791 = vpop.f32.mrb[0].mxu0
    %v792 = vadd.f32 0.0, %v791
    %v793 = vpop.f32.mrb[0].mxu0
    %794 = vmatprep.mubr.f32.mxu0 0.0
    %795 = vmatmul.mubr.f32.gmra.mrb[0].mxu0 %v368
    %v796 = vpop.f32.mrb[0].mxu0
    %v797 = vadd.f32 0.0, %v796
    %v798 = vpop.f32.mrb[0].mxu0
    %799 = vmatprep.mubr.f32.mxu0 0.0
    %800 = vmatmul.mubr.f32.gmra.mrb[0].mxu0 %v371
    %v801 = vpop.f32.mrb[0].mxu0
    %v802 = vadd.f32 0.0, %v801
    %v803 = vpop.f32.mrb[0].mxu0
    %804 = vmatprep.mubr.f32.mxu0 0.0
    %805 = vmatmul.mubr.f32.gmra.mrb[0].mxu0 %v374
    %v806 = vpop.f32.mrb[0].mxu0
    %v807 = vadd.f32 0.0, %v806
    %v808 = vpop.f32.mrb[0].mxu0
    %809 = vmatprep.mubr.f32.mxu0 0.0
    %810 = vmatmul.mubr.f32.gmra.mrb[0].mxu0 %v377
    %v811 = vpop.f32.mrb[0].mxu0
    %v812 = vadd.f32 0.0, %v811
    %v813 = vpop.f32.mrb[0].mxu0
    %814 = vmatprep.mubr.f32.mxu0 0.0
    %815 = vmatmul.mubr.f32.gmra.mrb[0].mxu0 %v380
    %v816 = vpop.f32.mrb[0].mxu0
    %v817 = vadd.f32 0.0, %v816
    %v818 = vpop.f32.mrb[0].mxu0
    %819 = vdwg.mxu0
    %v821 = vsel %vm186, %v56, 0
    %v824 = vsel %vm186, %v57, 0
    %v827 = vsel %vm186, %v58, 0
    %v830 = vsel %vm186, %v59, 0
    %v833 = vsel %vm186, %v60, 0
    %v836 = vsel %vm186, %v61, 0
    %v839 = vsel %vm186, %v62, 0
    %v842 = vsel %vm186, %v63, 0
    %v845 = vsel %vm186, %v64, 0
    %v848 = vsel %vm186, %v65, 0
    %v851 = vsel %vm186, %v66, 0
    %v854 = vsel %vm186, %v67, 0
    %v857 = vsel %vm186, %v68, 0
    %v860 = vsel %vm186, %v69, 0
    %v863 = vsel %vm186, %v70, 0
    %v866 = vsel %vm186, %v71, 0
    %v869 = vsel %vm186, %v72, 0
    %v872 = vsel %vm186, %v73, 0
    %v875 = vsel %vm186, %v74, 0
    %v878 = vsel %vm186, %v75, 0
    %v881 = vsel %vm186, %v76, 0
    %v884 = vsel %vm186, %v77, 0
    %v887 = vsel %vm186, %v78, 0
    %v890 = vsel %vm186, %v79, 0
    %v893 = vsel %vm186, %v80, 0
    %v896 = vsel %vm186, %v81, 0
    %v899 = vsel %vm186, %v82, 0
    %v902 = vsel %vm186, %v83, 0
    %v905 = vsel %vm186, %v84, 0
    %v908 = vsel %vm186, %v85, 0
    %v911 = vsel %vm186, %v86, 0
    %v914 = vsel %vm186, %v87, 0
    %v917 = vsel %vm186, %v88, 0
    %v920 = vsel %vm186, %v89, 0
    %v923 = vsel %vm186, %v90, 0
    %v926 = vsel %vm186, %v91, 0
    %v929 = vsel %vm186, %v92, 0
    %v932 = vsel %vm186, %v93, 0
    %v935 = vsel %vm186, %v94, 0
    %v938 = vsel %vm186, %v95, 0
    %v941 = vsel %vm186, %v96, 0
    %v944 = vsel %vm186, %v97, 0
    %v947 = vsel %vm186, %v98, 0
    %v950 = vsel %vm186, %v99, 0
    %v953 = vsel %vm186, %v100, 0
    %v956 = vsel %vm186, %v101, 0
    %v959 = vsel %vm186, %v102, 0
    %v962 = vsel %vm186, %v103, 0
    %v965 = vsel %vm186, %v104, 0
    %v968 = vsel %vm186, %v105, 0
    %v971 = vsel %vm186, %v106, 0
    %v974 = vsel %vm186, %v107, 0
    %v977 = vsel %vm186, %v108, 0
    %v980 = vsel %vm186, %v109, 0
    %v983 = vsel %vm186, %v110, 0
    %v986 = vsel %vm186, %v111, 0
    %v989 = vsel %vm186, %v112, 0
    %v992 = vsel %vm186, %v113, 0
    %v995 = vsel %vm186, %v114, 0
    %v998 = vsel %vm186, %v115, 0
    %v1001 = vsel %vm186, %v116, 0
    %v1004 = vsel %vm186, %v117, 0
    %v1007 = vsel %vm186, %v118, 0
    %v1010 = vsel %vm186, %v119, 0
    %v1013 = vsel %vm186, %v120, 0
    %v1016 = vsel %vm186, %v24, 0
    %v1019 = vsel %vm186, %v25, 0
    %v1022 = vsel %vm186, %v26, 0
    %v1025 = vsel %vm186, %v27, 0
    %v1028 = vsel %vm186, %v28, 0
    %v1031 = vsel %vm186, %v29, 0
    %v1034 = vsel %vm186, %v30, 0
    %v1037 = vsel %vm186, %v31, 0
    %v1040 = vsel %vm186, %v32, 0
    %v1043 = vsel %vm186, %v33, 0
    %v1046 = vsel %vm186, %v34, 0
    %v1049 = vsel %vm186, %v35, 0
    %v1052 = vsel %vm186, %v36, 0
    %v1055 = vsel %vm186, %v37, 0
    %v1058 = vsel %vm186, %v38, 0
    %v1061 = vsel %vm186, %v39, 0
    %1063 = vmatprep.subr.mxu0 0.0
    %1064 = vmatpush1.xpose.msra.mxu0 %v1016
    %1065 = vmatprep.subr.mxu0 0.0
    %1066 = vmatpush1.xpose.msra.mxu0 %v1019
    %1067 = vmatprep.subr.mxu0 0.0
    %1068 = vmatpush1.xpose.msra.mxu0 %v1022
    %1069 = vmatprep.subr.mxu0 0.0
    %1070 = vmatpush1.xpose.msra.mxu0 %v1025
    %1071 = vmatprep.subr.mxu0 0.0
    %1072 = vmatpush1.xpose.msra.mxu0 %v1028
    %1073 = vmatprep.subr.mxu0 0.0
    %1074 = vmatpush1.xpose.msra.mxu0 %v1031
    %1075 = vmatprep.subr.mxu0 0.0
    %1076 = vmatpush1.xpose.msra.mxu0 %v1034
    %1077 = vmatprep.subr.mxu0 0.0
    %1078 = vmatpush1.xpose.msra.mxu0 %v1037
    %1079 = vmatprep.subr.mxu0 0.0
    %1080 = vmatpush1.xpose.msra.mxu0 %v1040
    %1081 = vmatprep.subr.mxu0 0.0
    %1082 = vmatpush1.xpose.msra.mxu0 %v1043
    %1083 = vmatprep.subr.mxu0 0.0
    %1084 = vmatpush1.xpose.msra.mxu0 %v1046
    %1085 = vmatprep.subr.mxu0 0.0
    %1086 = vmatpush1.xpose.msra.mxu0 %v1049
    %1087 = vmatprep.subr.mxu0 0.0
    %1088 = vmatpush1.xpose.msra.mxu0 %v1052
    %1089 = vmatprep.subr.mxu0 0.0
    %1090 = vmatpush1.xpose.msra.mxu0 %v1055
    %1091 = vmatprep.subr.mxu0 0.0
    %1092 = vmatpush1.xpose.msra.mxu0 %v1058
    %1093 = vmatprep.subr.mxu0 0.0
    %1094 = vmatpush1.xpose.msra.mxu0 %v1061
    %1095 = vmatprep.subr.mxu0 0.0
    %1096 = vmatpush1.xpose.msra.mxu0 0.0
    %1097 = vmatprep.subr.mxu0 0.0
    %1098 = vmatpush1.xpose.msra.mxu0 0.0
    %1099 = vmatprep.subr.mxu0 0.0
    %1100 = vmatpush1.xpose.msra.mxu0 0.0
    %1101 = vmatprep.subr.mxu0 0.0
    %1102 = vmatpush1.xpose.msra.mxu0 0.0
    %1103 = vmatprep.subr.mxu0 0.0
    %1104 = vmatpush1.xpose.msra.mxu0 0.0
    %1105 = vmatprep.subr.mxu0 0.0
    %1106 = vmatpush1.xpose.msra.mxu0 0.0
    %1107 = vmatprep.subr.mxu0 0.0
    %1108 = vmatpush1.xpose.msra.mxu0 0.0
    %1109 = vmatprep.subr.mxu0 0.0
    %1110 = vmatpush1.xpose.msra.mxu0 0.0
    %1111 = vmatprep.subr.mxu0 0.0
    %1112 = vmatpush1.xpose.msra.mxu0 0.0
    %1113 = vmatprep.subr.mxu0 0.0
    %1114 = vmatpush1.xpose.msra.mxu0 0.0
    %1115 = vmatprep.subr.mxu0 0.0
    %1116 = vmatpush1.xpose.msra.mxu0 0.0
    %1117 = vmatprep.subr.mxu0 0.0
    %1118 = vmatpush1.xpose.msra.mxu0 0.0
    %1119 = vmatprep.subr.mxu0 0.0
    %1120 = vmatpush1.xpose.msra.mxu0 0.0
    %1121 = vmatprep.subr.mxu0 0.0
    %1122 = vmatpush1.xpose.msra.mxu0 0.0
    %1123 = vmatprep.subr.mxu0 0.0
    %1124 = vmatpush1.xpose.msra.mxu0 0.0
    %1125 = vmatprep.subr.mxu0 0.0
    %1126 = vmatpush1.xpose.msra.mxu0 0.0
    %1127 = vmatprep.mubr.f32.mxu0 0.0
    %1128 = vmatmul.mubr.f32.gmra.mrb[0].mxu0 %v821
    %v1129 = vpop.f32.mrb[0].mxu0
    %v1130 = vadd.f32 %v497, %v1129
    %v1131 = vpop.f32.mrb[0].mxu0
    %1132 = vmatprep.mubr.f32.mxu0 0.0
    %1133 = vmatmul.mubr.f32.gmra.mrb[0].mxu0 %v824
    %v1134 = vpop.f32.mrb[0].mxu0
    %v1135 = vadd.f32 %v502, %v1134
    %v1136 = vpop.f32.mrb[0].mxu0
    %1137 = vmatprep.mubr.f32.mxu0 0.0
    %1138 = vmatmul.mubr.f32.gmra.mrb[0].mxu0 %v827
    %v1139 = vpop.f32.mrb[0].mxu0
    %v1140 = vadd.f32 %v507, %v1139
    %v1141 = vpop.f32.mrb[0].mxu0
    %1142 = vmatprep.mubr.f32.mxu0 0.0
    %1143 = vmatmul.mubr.f32.gmra.mrb[0].mxu0 %v830
    %v1144 = vpop.f32.mrb[0].mxu0
    %v1145 = vadd.f32 %v512, %v1144
    %v1146 = vpop.f32.mrb[0].mxu0
    %1147 = vmatprep.mubr.f32.mxu0 0.0
    %1148 = vmatmul.mubr.f32.gmra.mrb[0].mxu0 %v833
    %v1149 = vpop.f32.mrb[0].mxu0
    %v1150 = vadd.f32 %v517, %v1149
    %v1151 = vpop.f32.mrb[0].mxu0
    %1152 = vmatprep.mubr.f32.mxu0 0.0
    %1153 = vmatmul.mubr.f32.gmra.mrb[0].mxu0 %v836
    %v1154 = vpop.f32.mrb[0].mxu0
    %v1155 = vadd.f32 %v522, %v1154
    %v1156 = vpop.f32.mrb[0].mxu0
    %1157 = vmatprep.mubr.f32.mxu0 0.0
    %1158 = vmatmul.mubr.f32.gmra.mrb[0].mxu0 %v839
    %v1159 = vpop.f32.mrb[0].mxu0
    %v1160 = vadd.f32 %v527, %v1159
    %v1161 = vpop.f32.mrb[0].mxu0
    %1162 = vmatprep.mubr.f32.mxu0 0.0
    %1163 = vmatmul.mubr.f32.gmra.mrb[0].mxu0 %v842
    %v1164 = vpop.f32.mrb[0].mxu0
    %v1165 = vadd.f32 %v532, %v1164
    %v1166 = vpop.f32.mrb[0].mxu0
    %1167 = vmatprep.mubr.f32.mxu0 0.0
    %1168 = vmatmul.mubr.f32.gmra.mrb[0].mxu0 %v845
    %v1169 = vpop.f32.mrb[0].mxu0
    %v1170 = vadd.f32 %v537, %v1169
    %v1171 = vpop.f32.mrb[0].mxu0
    %1172 = vmatprep.mubr.f32.mxu0 0.0
    %1173 = vmatmul.mubr.f32.gmra.mrb[0].mxu0 %v848
    %v1174 = vpop.f32.mrb[0].mxu0
    %v1175 = vadd.f32 %v542, %v1174
    %v1176 = vpop.f32.mrb[0].mxu0
    %1177 = vmatprep.mubr.f32.mxu0 0.0
    %1178 = vmatmul.mubr.f32.gmra.mrb[0].mxu0 %v851
    %v1179 = vpop.f32.mrb[0].mxu0
    %v1180 = vadd.f32 %v547, %v1179
    %v1181 = vpop.f32.mrb[0].mxu0
    %1182 = vmatprep.mubr.f32.mxu0 0.0
    %1183 = vmatmul.mubr.f32.gmra.mrb[0].mxu0 %v854
    %v1184 = vpop.f32.mrb[0].mxu0
    %v1185 = vadd.f32 %v552, %v1184
    %v1186 = vpop.f32.mrb[0].mxu0
    %1187 = vmatprep.mubr.f32.mxu0 0.0
    %1188 = vmatmul.mubr.f32.gmra.mrb[0].mxu0 %v857
    %v1189 = vpop.f32.mrb[0].mxu0
    %v1190 = vadd.f32 %v557, %v1189
    %v1191 = vpop.f32.mrb[0].mxu0
    %1192 = vmatprep.mubr.f32.mxu0 0.0
    %1193 = vmatmul.mubr.f32.gmra.mrb[0].mxu0 %v860
    %v1194 = vpop.f32.mrb[0].mxu0
    %v1195 = vadd.f32 %v562, %v1194
    %v1196 = vpop.f32.mrb[0].mxu0
    %1197 = vmatprep.mubr.f32.mxu0 0.0
    %1198 = vmatmul.mubr.f32.gmra.mrb[0].mxu0 %v863
    %v1199 = vpop.f32.mrb[0].mxu0
    %v1200 = vadd.f32 %v567, %v1199
    %v1201 = vpop.f32.mrb[0].mxu0
    %1202 = vmatprep.mubr.f32.mxu0 0.0
    %1203 = vmatmul.mubr.f32.gmra.mrb[0].mxu0 %v866
    %v1204 = vpop.f32.mrb[0].mxu0
    %v1205 = vadd.f32 %v572, %v1204
    %v1206 = vpop.f32.mrb[0].mxu0
    %1207 = vmatprep.mubr.f32.mxu0 0.0
    %1208 = vmatmul.mubr.f32.gmra.mrb[0].mxu0 %v869
    %v1209 = vpop.f32.mrb[0].mxu0
    %v1210 = vadd.f32 %v577, %v1209
    %v1211 = vpop.f32.mrb[0].mxu0
    %1212 = vmatprep.mubr.f32.mxu0 0.0
    %1213 = vmatmul.mubr.f32.gmra.mrb[0].mxu0 %v872
    %v1214 = vpop.f32.mrb[0].mxu0
    %v1215 = vadd.f32 %v582, %v1214
    %v1216 = vpop.f32.mrb[0].mxu0
    %1217 = vmatprep.mubr.f32.mxu0 0.0
    %1218 = vmatmul.mubr.f32.gmra.mrb[0].mxu0 %v875
    %v1219 = vpop.f32.mrb[0].mxu0
    %v1220 = vadd.f32 %v587, %v1219
    %v1221 = vpop.f32.mrb[0].mxu0
    %1222 = vmatprep.mubr.f32.mxu0 0.0
    %1223 = vmatmul.mubr.f32.gmra.mrb[0].mxu0 %v878
    %v1224 = vpop.f32.mrb[0].mxu0
    %v1225 = vadd.f32 %v592, %v1224
    %v1226 = vpop.f32.mrb[0].mxu0
    %1227 = vmatprep.mubr.f32.mxu0 0.0
    %1228 = vmatmul.mubr.f32.gmra.mrb[0].mxu0 %v881
    %v1229 = vpop.f32.mrb[0].mxu0
    %v1230 = vadd.f32 %v597, %v1229
    %v1231 = vpop.f32.mrb[0].mxu0
    %1232 = vmatprep.mubr.f32.mxu0 0.0
    %1233 = vmatmul.mubr.f32.gmra.mrb[0].mxu0 %v884
    %v1234 = vpop.f32.mrb[0].mxu0
    %v1235 = vadd.f32 %v602, %v1234
    %v1236 = vpop.f32.mrb[0].mxu0
    %1237 = vmatprep.mubr.f32.mxu0 0.0
    %1238 = vmatmul.mubr.f32.gmra.mrb[0].mxu0 %v887
    %v1239 = vpop.f32.mrb[0].mxu0
    %v1240 = vadd.f32 %v607, %v1239
    %v1241 = vpop.f32.mrb[0].mxu0
    %1242 = vmatprep.mubr.f32.mxu0 0.0
    %1243 = vmatmul.mubr.f32.gmra.mrb[0].mxu0 %v890
    %v1244 = vpop.f32.mrb[0].mxu0
    %v1245 = vadd.f32 %v612, %v1244
    %v1246 = vpop.f32.mrb[0].mxu0
    %1247 = vmatprep.mubr.f32.mxu0 0.0
    %1248 = vmatmul.mubr.f32.gmra.mrb[0].mxu0 %v893
    %v1249 = vpop.f32.mrb[0].mxu0
    %v1250 = vadd.f32 %v617, %v1249
    %v1251 = vpop.f32.mrb[0].mxu0
    %1252 = vmatprep.mubr.f32.mxu0 0.0
    %1253 = vmatmul.mubr.f32.gmra.mrb[0].mxu0 %v896
    %v1254 = vpop.f32.mrb[0].mxu0
    %v1255 = vadd.f32 %v622, %v1254
    %v1256 = vpop.f32.mrb[0].mxu0
    %1257 = vmatprep.mubr.f32.mxu0 0.0
    %1258 = vmatmul.mubr.f32.gmra.mrb[0].mxu0 %v899
    %v1259 = vpop.f32.mrb[0].mxu0
    %v1260 = vadd.f32 %v627, %v1259
    %v1261 = vpop.f32.mrb[0].mxu0
    %1262 = vmatprep.mubr.f32.mxu0 0.0
    %1263 = vmatmul.mubr.f32.gmra.mrb[0].mxu0 %v902
    %v1264 = vpop.f32.mrb[0].mxu0
    %v1265 = vadd.f32 %v632, %v1264
    %v1266 = vpop.f32.mrb[0].mxu0
    %1267 = vmatprep.mubr.f32.mxu0 0.0
    %1268 = vmatmul.mubr.f32.gmra.mrb[0].mxu0 %v905
    %v1269 = vpop.f32.mrb[0].mxu0
    %v1270 = vadd.f32 %v637, %v1269
    %v1271 = vpop.f32.mrb[0].mxu0
    %1272 = vmatprep.mubr.f32.mxu0 0.0
    %1273 = vmatmul.mubr.f32.gmra.mrb[0].mxu0 %v908
    %v1274 = vpop.f32.mrb[0].mxu0
    %v1275 = vadd.f32 %v642, %v1274
    %v1276 = vpop.f32.mrb[0].mxu0
    %1277 = vmatprep.mubr.f32.mxu0 0.0
    %1278 = vmatmul.mubr.f32.gmra.mrb[0].mxu0 %v911
    %v1279 = vpop.f32.mrb[0].mxu0
    %v1280 = vadd.f32 %v647, %v1279
    %v1281 = vpop.f32.mrb[0].mxu0
    %1282 = vmatprep.mubr.f32.mxu0 0.0
    %1283 = vmatmul.mubr.f32.gmra.mrb[0].mxu0 %v914
    %v1284 = vpop.f32.mrb[0].mxu0
    %v1285 = vadd.f32 %v652, %v1284
    %v1286 = vpop.f32.mrb[0].mxu0
    %1287 = vmatprep.mubr.f32.mxu0 0.0
    %1288 = vmatmul.mubr.f32.gmra.mrb[0].mxu0 %v917
    %v1289 = vpop.f32.mrb[0].mxu0
    %v1290 = vadd.f32 %v657, %v1289
    %v1291 = vpop.f32.mrb[0].mxu0
    %1292 = vmatprep.mubr.f32.mxu0 0.0
    %1293 = vmatmul.mubr.f32.gmra.mrb[0].mxu0 %v920
    %v1294 = vpop.f32.mrb[0].mxu0
    %v1295 = vadd.f32 %v662, %v1294
    %v1296 = vpop.f32.mrb[0].mxu0
    %1297 = vmatprep.mubr.f32.mxu0 0.0
    %1298 = vmatmul.mubr.f32.gmra.mrb[0].mxu0 %v923
    %v1299 = vpop.f32.mrb[0].mxu0
    %v1300 = vadd.f32 %v667, %v1299
    %v1301 = vpop.f32.mrb[0].mxu0
    %1302 = vmatprep.mubr.f32.mxu0 0.0
    %1303 = vmatmul.mubr.f32.gmra.mrb[0].mxu0 %v926
    %v1304 = vpop.f32.mrb[0].mxu0
    %v1305 = vadd.f32 %v672, %v1304
    %v1306 = vpop.f32.mrb[0].mxu0
    %1307 = vmatprep.mubr.f32.mxu0 0.0
    %1308 = vmatmul.mubr.f32.gmra.mrb[0].mxu0 %v929
    %v1309 = vpop.f32.mrb[0].mxu0
    %v1310 = vadd.f32 %v677, %v1309
    %v1311 = vpop.f32.mrb[0].mxu0
    %1312 = vmatprep.mubr.f32.mxu0 0.0
    %1313 = vmatmul.mubr.f32.gmra.mrb[0].mxu0 %v932
    %v1314 = vpop.f32.mrb[0].mxu0
    %v1315 = vadd.f32 %v682, %v1314
    %v1316 = vpop.f32.mrb[0].mxu0
    %1317 = vmatprep.mubr.f32.mxu0 0.0
    %1318 = vmatmul.mubr.f32.gmra.mrb[0].mxu0 %v935
    %v1319 = vpop.f32.mrb[0].mxu0
    %v1320 = vadd.f32 %v687, %v1319
    %v1321 = vpop.f32.mrb[0].mxu0
    %1322 = vmatprep.mubr.f32.mxu0 0.0
    %1323 = vmatmul.mubr.f32.gmra.mrb[0].mxu0 %v938
    %v1324 = vpop.f32.mrb[0].mxu0
    %v1325 = vadd.f32 %v692, %v1324
    %v1326 = vpop.f32.mrb[0].mxu0
    %1327 = vmatprep.mubr.f32.mxu0 0.0
    %1328 = vmatmul.mubr.f32.gmra.mrb[0].mxu0 %v941
    %v1329 = vpop.f32.mrb[0].mxu0
    %v1330 = vadd.f32 %v697, %v1329
    %v1331 = vpop.f32.mrb[0].mxu0
    %1332 = vmatprep.mubr.f32.mxu0 0.0
    %1333 = vmatmul.mubr.f32.gmra.mrb[0].mxu0 %v944
    %v1334 = vpop.f32.mrb[0].mxu0
    %v1335 = vadd.f32 %v702, %v1334
    %v1336 = vpop.f32.mrb[0].mxu0
    %1337 = vmatprep.mubr.f32.mxu0 0.0
    %1338 = vmatmul.mubr.f32.gmra.mrb[0].mxu0 %v947
    %v1339 = vpop.f32.mrb[0].mxu0
    %v1340 = vadd.f32 %v707, %v1339
    %v1341 = vpop.f32.mrb[0].mxu0
    %1342 = vmatprep.mubr.f32.mxu0 0.0
    %1343 = vmatmul.mubr.f32.gmra.mrb[0].mxu0 %v950
    %v1344 = vpop.f32.mrb[0].mxu0
    %v1345 = vadd.f32 %v712, %v1344
    %v1346 = vpop.f32.mrb[0].mxu0
    %1347 = vmatprep.mubr.f32.mxu0 0.0
    %1348 = vmatmul.mubr.f32.gmra.mrb[0].mxu0 %v953
    %v1349 = vpop.f32.mrb[0].mxu0
    %v1350 = vadd.f32 %v717, %v1349
    %v1351 = vpop.f32.mrb[0].mxu0
    %1352 = vmatprep.mubr.f32.mxu0 0.0
    %1353 = vmatmul.mubr.f32.gmra.mrb[0].mxu0 %v956
    %v1354 = vpop.f32.mrb[0].mxu0
    %v1355 = vadd.f32 %v722, %v1354
    %v1356 = vpop.f32.mrb[0].mxu0
    %1357 = vmatprep.mubr.f32.mxu0 0.0
    %1358 = vmatmul.mubr.f32.gmra.mrb[0].mxu0 %v959
    %v1359 = vpop.f32.mrb[0].mxu0
    %v1360 = vadd.f32 %v727, %v1359
    %v1361 = vpop.f32.mrb[0].mxu0
    %1362 = vmatprep.mubr.f32.mxu0 0.0
    %1363 = vmatmul.mubr.f32.gmra.mrb[0].mxu0 %v962
    %v1364 = vpop.f32.mrb[0].mxu0
    %v1365 = vadd.f32 %v732, %v1364
    %v1366 = vpop.f32.mrb[0].mxu0
    %1367 = vmatprep.mubr.f32.mxu0 0.0
    %1368 = vmatmul.mubr.f32.gmra.mrb[0].mxu0 %v965
    %v1369 = vpop.f32.mrb[0].mxu0
    %v1370 = vadd.f32 %v737, %v1369
    %v1371 = vpop.f32.mrb[0].mxu0
    %1372 = vmatprep.mubr.f32.mxu0 0.0
    %1373 = vmatmul.mubr.f32.gmra.mrb[0].mxu0 %v968
    %v1374 = vpop.f32.mrb[0].mxu0
    %v1375 = vadd.f32 %v742, %v1374
    %v1376 = vpop.f32.mrb[0].mxu0
    %1377 = vmatprep.mubr.f32.mxu0 0.0
    %1378 = vmatmul.mubr.f32.gmra.mrb[0].mxu0 %v971
    %v1379 = vpop.f32.mrb[0].mxu0
    %v1380 = vadd.f32 %v747, %v1379
    %v1381 = vpop.f32.mrb[0].mxu0
    %1382 = vmatprep.mubr.f32.mxu0 0.0
    %1383 = vmatmul.mubr.f32.gmra.mrb[0].mxu0 %v974
    %v1384 = vpop.f32.mrb[0].mxu0
    %v1385 = vadd.f32 %v752, %v1384
    %v1386 = vpop.f32.mrb[0].mxu0
    %1387 = vmatprep.mubr.f32.mxu0 0.0
    %1388 = vmatmul.mubr.f32.gmra.mrb[0].mxu0 %v977
    %v1389 = vpop.f32.mrb[0].mxu0
    %v1390 = vadd.f32 %v757, %v1389
    %v1391 = vpop.f32.mrb[0].mxu0
    %1392 = vmatprep.mubr.f32.mxu0 0.0
    %1393 = vmatmul.mubr.f32.gmra.mrb[0].mxu0 %v980
    %v1394 = vpop.f32.mrb[0].mxu0
    %v1395 = vadd.f32 %v762, %v1394
    %v1396 = vpop.f32.mrb[0].mxu0
    %1397 = vmatprep.mubr.f32.mxu0 0.0
    %1398 = vmatmul.mubr.f32.gmra.mrb[0].mxu0 %v983
    %v1399 = vpop.f32.mrb[0].mxu0
    %v1400 = vadd.f32 %v767, %v1399
    %v1401 = vpop.f32.mrb[0].mxu0
    %1402 = vmatprep.mubr.f32.mxu0 0.0
    %1403 = vmatmul.mubr.f32.gmra.mrb[0].mxu0 %v986
    %v1404 = vpop.f32.mrb[0].mxu0
    %v1405 = vadd.f32 %v772, %v1404
    %v1406 = vpop.f32.mrb[0].mxu0
    %1407 = vmatprep.mubr.f32.mxu0 0.0
    %1408 = vmatmul.mubr.f32.gmra.mrb[0].mxu0 %v989
    %v1409 = vpop.f32.mrb[0].mxu0
    %v1410 = vadd.f32 %v777, %v1409
    %v1411 = vpop.f32.mrb[0].mxu0
    %1412 = vmatprep.mubr.f32.mxu0 0.0
    %1413 = vmatmul.mubr.f32.gmra.mrb[0].mxu0 %v992
    %v1414 = vpop.f32.mrb[0].mxu0
    %v1415 = vadd.f32 %v782, %v1414
    %v1416 = vpop.f32.mrb[0].mxu0
    %1417 = vmatprep.mubr.f32.mxu0 0.0
    %1418 = vmatmul.mubr.f32.gmra.mrb[0].mxu0 %v995
    %v1419 = vpop.f32.mrb[0].mxu0
    %v1420 = vadd.f32 %v787, %v1419
    %v1421 = vpop.f32.mrb[0].mxu0
    %1422 = vmatprep.mubr.f32.mxu0 0.0
    %1423 = vmatmul.mubr.f32.gmra.mrb[0].mxu0 %v998
    %v1424 = vpop.f32.mrb[0].mxu0
    %v1425 = vadd.f32 %v792, %v1424
    %v1426 = vpop.f32.mrb[0].mxu0
    %1427 = vmatprep.mubr.f32.mxu0 0.0
    %1428 = vmatmul.mubr.f32.gmra.mrb[0].mxu0 %v1001
    %v1429 = vpop.f32.mrb[0].mxu0
    %v1430 = vadd.f32 %v797, %v1429
    %v1431 = vpop.f32.mrb[0].mxu0
    %1432 = vmatprep.mubr.f32.mxu0 0.0
    %1433 = vmatmul.mubr.f32.gmra.mrb[0].mxu0 %v1004
    %v1434 = vpop.f32.mrb[0].mxu0
    %v1435 = vadd.f32 %v802, %v1434
    %v1436 = vpop.f32.mrb[0].mxu0
    %1437 = vmatprep.mubr.f32.mxu0 0.0
    %1438 = vmatmul.mubr.f32.gmra.mrb[0].mxu0 %v1007
    %v1439 = vpop.f32.mrb[0].mxu0
    %v1440 = vadd.f32 %v807, %v1439
    %v1441 = vpop.f32.mrb[0].mxu0
    %1442 = vmatprep.mubr.f32.mxu0 0.0
    %1443 = vmatmul.mubr.f32.gmra.mrb[0].mxu0 %v1010
    %v1444 = vpop.f32.mrb[0].mxu0
    %v1445 = vadd.f32 %v812, %v1444
    %v1446 = vpop.f32.mrb[0].mxu0
    %1447 = vmatprep.mubr.f32.mxu0 0.0
    %1448 = vmatmul.mubr.f32.gmra.mrb[0].mxu0 %v1013
    %v1449 = vpop.f32.mrb[0].mxu0
    %v1450 = vadd.f32 %v817, %v1449
    %v1451 = vpop.f32.mrb[0].mxu0
    %1452 = vdwg.mxu0
    %v1453 = vmul.f32 %v1130, %v1290
    %v1454 = vmul.f32 %v1135, %v1295
    %v1455 = vmul.f32 %v1140, %v1300
    %v1456 = vmul.f32 %v1145, %v1305
    %v1457 = vmul.f32 %v1150, %v1310
    %v1458 = vmul.f32 %v1155, %v1315
    %v1459 = vmul.f32 %v1160, %v1320
    %v1460 = vmul.f32 %v1165, %v1325
    %v1461 = vmul.f32 %v1170, %v1330
    %v1462 = vmul.f32 %v1175, %v1335
    %v1463 = vmul.f32 %v1180, %v1340
    %v1464 = vmul.f32 %v1185, %v1345
    %v1465 = vmul.f32 %v1190, %v1350
    %v1466 = vmul.f32 %v1195, %v1355
    %v1467 = vmul.f32 %v1200, %v1360
    %v1468 = vmul.f32 %v1205, %v1365
    %v1469 = vmul.f32 %v1210, %v1370
    %v1470 = vmul.f32 %v1215, %v1375
    %v1471 = vmul.f32 %v1220, %v1380
    %v1472 = vmul.f32 %v1225, %v1385
    %v1473 = vmul.f32 %v1230, %v1390
    %v1474 = vmul.f32 %v1235, %v1395
    %v1475 = vmul.f32 %v1240, %v1400
    %v1476 = vmul.f32 %v1245, %v1405
    %v1477 = vmul.f32 %v1250, %v1410
    %v1478 = vmul.f32 %v1255, %v1415
    %v1479 = vmul.f32 %v1260, %v1420
    %v1480 = vmul.f32 %v1265, %v1425
    %v1481 = vmul.f32 %v1270, %v1430
    %v1482 = vmul.f32 %v1275, %v1435
    %v1483 = vmul.f32 %v1280, %v1440
    %v1484 = vmul.f32 %v1285, %v1445
    %v1485 = vld [vmem:[%s4] sm:$0xff]
    %v1486 = vld [vmem:[%s4 + $0x8] sm:$0xff]
    %1487 = vmatprep.subr.mxu0 0.0
    %1488 = vmatpush1.msra.mxu0 %v1453
    %1489 = vmatprep.subr.mxu0 0.0
    %1490 = vmatpush1.msra.mxu0 %v1454
    %1491 = vmatprep.subr.mxu0 0.0
    %1492 = vmatpush1.msra.mxu0 %v1455
    %1493 = vmatprep.subr.mxu0 0.0
    %1494 = vmatpush1.msra.mxu0 %v1456
    %1495 = vmatprep.subr.mxu0 0.0
    %1496 = vmatpush1.msra.mxu0 %v1457
    %1497 = vmatprep.subr.mxu0 0.0
    %1498 = vmatpush1.msra.mxu0 %v1458
    %1499 = vmatprep.subr.mxu0 0.0
    %1500 = vmatpush1.msra.mxu0 %v1459
    %1501 = vmatprep.subr.mxu0 0.0
    %1502 = vmatpush1.msra.mxu0 %v1460
    %1503 = vmatprep.subr.mxu0 0.0
    %1504 = vmatpush1.msra.mxu0 %v1461
    %1505 = vmatprep.subr.mxu0 0.0
    %1506 = vmatpush1.msra.mxu0 %v1462
    %1507 = vmatprep.subr.mxu0 0.0
    %1508 = vmatpush1.msra.mxu0 %v1463
    %1509 = vmatprep.subr.mxu0 0.0
    %1510 = vmatpush1.msra.mxu0 %v1464
    %1511 = vmatprep.subr.mxu0 0.0
    %1512 = vmatpush1.msra.mxu0 %v1465
    %1513 = vmatprep.subr.mxu0 0.0
    %1514 = vmatpush1.msra.mxu0 %v1466
    %1515 = vmatprep.subr.mxu0 0.0
    %1516 = vmatpush1.msra.mxu0 %v1467
    %1517 = vmatprep.subr.mxu0 0.0
    %1518 = vmatpush1.msra.mxu0 %v1468
    %1519 = vmatprep.subr.mxu0 0.0
    %1520 = vmatpush1.msra.mxu0 %v1469
    %1521 = vmatprep.subr.mxu0 0.0
    %1522 = vmatpush1.msra.mxu0 %v1470
    %1523 = vmatprep.subr.mxu0 0.0
    %1524 = vmatpush1.msra.mxu0 %v1471
    %1525 = vmatprep.subr.mxu0 0.0
    %1526 = vmatpush1.msra.mxu0 %v1472
    %1527 = vmatprep.subr.mxu0 0.0
    %1528 = vmatpush1.msra.mxu0 %v1473
    %1529 = vmatprep.subr.mxu0 0.0
    %1530 = vmatpush1.msra.mxu0 %v1474
    %1531 = vmatprep.subr.mxu0 0.0
    %1532 = vmatpush1.msra.mxu0 %v1475
    %1533 = vmatprep.subr.mxu0 0.0
    %1534 = vmatpush1.msra.mxu0 %v1476
    %1535 = vmatprep.subr.mxu0 0.0
    %1536 = vmatpush1.msra.mxu0 %v1477
    %1537 = vmatprep.subr.mxu0 0.0
    %1538 = vmatpush1.msra.mxu0 %v1478
    %1539 = vmatprep.subr.mxu0 0.0
    %1540 = vmatpush1.msra.mxu0 %v1479
    %1541 = vmatprep.subr.mxu0 0.0
    %1542 = vmatpush1.msra.mxu0 %v1480
    %1543 = vmatprep.subr.mxu0 0.0
    %1544 = vmatpush1.msra.mxu0 %v1481
    %1545 = vmatprep.subr.mxu0 0.0
    %1546 = vmatpush1.msra.mxu0 %v1482
    %1547 = vmatprep.subr.mxu0 0.0
    %1548 = vmatpush1.msra.mxu0 %v1483
    %1549 = vmatprep.subr.mxu0 0.0
    %1550 = vmatpush1.msra.mxu0 %v1484
    %1551 = vmatprep.mubr.f32.mxu0 %v1486
    %1552 = vmatmul.mubr.f32.gmra.mrb[0].mxu0 %v1485
    %v1553 = vpop.f32.mrb[0].mxu0
    %v1554 = vadd.f32 %v1450, %v1553
    %v1555 = vpop.f32.mrb[0].mxu0
    %1556 = vdwg.mxu0
    %v1557 = vld [vmem:[%s5] sm:$0xff]
    %1559 = vset.pattern.permute.xlu0 0
    %1560 = vperm.xlu0 %1559, %v1557
    %v1561 = vpop.permute.xlu0 %1560
    %v1563 = vadd.f32 %v1554, %v1561
    %1564 = vst [vmem:[#allocation2] sm:$0xff] %v1563
    // Predicated region
    $region26: #{tpu_custom_call.1} parent=1 // pred_check
      _
    $region27: #{tpu_custom_call.1} parent=1 // pred_check_branch
      %1566 = sbr.rel (0) target = $region29
    $region28: #{tpu_custom_call.1} parent=1 // pred_region
      %s1568 = ssub.s32 128, 128
      %1569 = vsyncadd [#allocation3], %s1568
      %s1571 = sshll.u32 [#allocation2], 4
      %s1572 = int_to_ptr.vmem [resolvable:$true] %s1571
      %1574 = dma.vmem_to_hbm [thread:$0]  %s1572, 128, %s6, [#allocation3]
    $region29: #{tpu_custom_call.1} parent=1 // pred_fallthru
      _
    // Predicated region
    $region30: #{tpu_custom_call.1} parent=1 // pred_check
      _
    $region31: #{tpu_custom_call.1} parent=1 // pred_check_branch
      %1576 = sbr.rel (0) target = $region33
    $region32: #{tpu_custom_call.1} parent=1 // pred_region
      %1577 = dma.done [#allocation3], 128
    $region33: #{tpu_custom_call.1} parent=1 // pred_fallthru
      _
    %1578 = vsyncpa [#allocation3], 1

</llo_original>
